<compile_context>
chip_gen: v7x
topology: tpu7x:2x2x1
jax: 0.10.0
libtpu: 0.0.40
codegen_flags: <defaults>
</compile_context>

<pallas_src>
import functools

import jax
import jax.numpy as jnp
from jax.experimental import pallas as pl
from jax.experimental.pallas import tpu as pltpu


def _round_up(x, m):
    return ((x + m - 1) // m) * m


def _ln_rows(y, res, g, b, inv_h, eps):
    """Residual add + LayerNorm over the last dim, all f32."""
    y = y + res
    s = jnp.sum(y, axis=-1, keepdims=True)
    ss = jnp.sum(y * y, axis=-1, keepdims=True)
    mean = s * inv_h
    var = jnp.maximum(ss * inv_h - mean * mean, 0.0)
    return (y - mean) * jax.lax.rsqrt(var + eps) * g + b


def _bert_output_kernel(x_ref, w_ref, b_ref, res_ref, g_ref, beta_ref, o_ref,
                        *, eps, mx_dtype, split):
    # x_ref:   (tm, I)  intermediate activations for this token tile
    # w_ref:   (I,  H)  dense weight, [in, out] layout (bf16, VMEM-resident)
    # b_ref:   (1,  H)  dense bias
    # res_ref: (tm, H)  residual (input_tensor) tile
    # g_ref:   (1,  H)  LayerNorm gamma
    # beta_ref:(1,  H)  LayerNorm beta
    # o_ref:   (tm, H)
    w = w_ref[...]
    bias = b_ref[...].astype(jnp.float32)
    g = g_ref[...].astype(jnp.float32)
    beta = beta_ref[...].astype(jnp.float32)
    inv_h = jnp.float32(1.0 / o_ref.shape[-1])

    tm = x_ref.shape[0]
    n_half = 2 if split else 1
    rows = tm // n_half

    # TODO(synk): training-mode dropout (pltpu.prng_seed + stateful_bernoulli);
    # inference dropout is the identity, matching module.eval().

    # Issue all MXU matmuls first, then the VPU/XLU epilogues, so the LLO
    # scheduler can overlap epilogue(half A) with the matmul drain of half B.
    ys = []
    for h in range(n_half):
        xs = x_ref[h * rows:(h + 1) * rows, :].astype(mx_dtype)
        ys.append(jnp.dot(xs, w, preferred_element_type=jnp.float32) + bias)
    for h in range(n_half):
        r = res_ref[h * rows:(h + 1) * rows, :].astype(jnp.float32)
        out = _ln_rows(ys[h], r, g, beta, inv_h, eps)
        o_ref[h * rows:(h + 1) * rows, :] = out.astype(o_ref.dtype)


def bert_output(hidden_states, input_tensor, weight, bias, gamma, beta,
                eps=1e-12, tm=256, matmul_dtype=jnp.bfloat16):
    """hidden_states: [B,S,I]; input_tensor: [B,S,H]; weight: [I,H];
    bias/gamma/beta: [H]."""
    B, S, I = hidden_states.shape
    H = input_tensor.shape[-1]
    M = B * S

    # Free (contiguous) reshapes: flatten batch*seq into a token axis.
    x = hidden_states.reshape(M, I)
    res = input_tensor.reshape(M, H)
    w = weight.astype(matmul_dtype)          # resident copy in VMEM is bf16
    bias2d = bias.reshape(1, H)
    gamma2d = gamma.reshape(1, H)
    beta2d = beta.reshape(1, H)

    out_dtype = input_tensor.dtype
    x_bytes = jnp.dtype(x.dtype).itemsize
    r_bytes = jnp.dtype(res.dtype).itemsize
    o_bytes = jnp.dtype(out_dtype).itemsize
    w_bytes = jnp.dtype(w.dtype).itemsize

    def working_set_bytes(t):
        weight_res = I * H * w_bytes                                  # Buffered(1)
        streamed = 2 * t * (I * x_bytes + H * r_bytes + H * o_bytes)  # double-buffered
        vectors = 3 * H * 4
        return weight_res + streamed + vectors

    # Tile selection: fixed tm (cap at requested), clamped for tiny inputs,
    # shrunk if the working set would blow a conservative 48 MiB budget
    # (keeps double-buffering alive on v7x's 64 MiB / v5e's small scoped VMEM).
    # TODO(synk): if even tm=64 overflows (huge I*H weight), add a K grid axis
    # over I with an f32 accumulator scratch + pl.when epilogue instead of a
    # fully resident weight.
    tm = max(8, min(int(tm), _round_up(M, 8)))
    tm = _round_up(tm, 8)
    while tm > 64 and working_set_bytes(tm) > (48 << 20):
        tm //= 2
    split = (tm >= 16) and (tm % 16 == 0)

    grid = (pl.cdiv(M, tm),)   # ragged last block is masked by Pallas
    vmem_limit = int(min(64 << 20,
                         max(16 << 20,
                             int(1.4 * working_set_bytes(tm)) + (1 << 20))))

    cost = pl.CostEstimate(
        flops=2 * M * I * H,
        transcendentals=M,  # rsqrt per token row
        bytes_accessed=(M * I * x_bytes + I * H * w_bytes + M * H * r_bytes
                        + M * H * o_bytes + 3 * H * 4),
    )

    resident = dict(pipeline_mode=pl.Buffered(1))  # single buffer, const index

    out = pl.pallas_call(
        functools.partial(_bert_output_kernel, eps=float(eps),
                          mx_dtype=matmul_dtype, split=split),
        out_shape=jax.ShapeDtypeStruct((M, H), out_dtype),
        grid_spec=pl.GridSpec(
            grid=grid,
            in_specs=[
                pl.BlockSpec((tm, I), lambda i: (i, 0)),              # x (streamed)
                pl.BlockSpec((I, H), lambda i: (0, 0), **resident),   # weight
                pl.BlockSpec((1, H), lambda i: (0, 0), **resident),   # bias
                pl.BlockSpec((tm, H), lambda i: (i, 0)),              # residual
                pl.BlockSpec((1, H), lambda i: (0, 0), **resident),   # gamma
                pl.BlockSpec((1, H), lambda i: (0, 0), **resident),   # beta
            ],
            out_specs=pl.BlockSpec((tm, H), lambda i: (i, 0)),
        ),
        compiler_params=pltpu.CompilerParams(
            dimension_semantics=("parallel",),
            vmem_limit_bytes=vmem_limit),
        cost_estimate=cost,
    )(x, w, bias2d, res, gamma2d, beta2d)

    return out.reshape(B, S, H)


if __name__ == "__main__":
    # Small shapes consistent with BertOutput: hidden=32, intermediate=4*32.
    B, S, H = 2, 8, 32
    I = 4 * H
    eps = 1e-12

    key = jax.random.PRNGKey(0)
    k1, k2, k3, k4, k5, k6 = jax.random.split(key, 6)

    hidden_states = jax.random.normal(k1, (B, S, I), dtype=jnp.float32)
    input_tensor = jax.random.normal(k2, (B, S, H), dtype=jnp.float32)
    w_torch = jax.random.normal(k3, (H, I), dtype=jnp.float32) * 0.02  # [out,in]
    bias = jax.random.normal(k4, (H,), dtype=jnp.float32) * 0.02
    gamma = 1.0 + 0.1 * jax.random.normal(k5, (H,), dtype=jnp.float32)
    beta = 0.1 * jax.random.normal(k6, (H,), dtype=jnp.float32)
    weight = w_torch.T  # [I, H] layout for the kernel

    out = bert_output(hidden_states, input_tensor, weight, bias, gamma, beta,
                      eps=eps)
    jax.block_until_ready(out)

    # Reference in plain JAX (dropout is identity at inference); same bf16
    # matmul precision as the kernel, f32 accumulate + f32 epilogue.
    xb = hidden_states.astype(jnp.bfloat16)
    wb = weight.astype(jnp.bfloat16)
    y = jnp.einsum("bsi,ih->bsh", xb, wb,
                   preferred_element_type=jnp.float32) + bias
    y = y + input_tensor
    mu = jnp.mean(y, axis=-1, keepdims=True)
    var = jnp.mean((y - mu) ** 2, axis=-1, keepdims=True)
    ref = (y - mu) * jax.lax.rsqrt(var + eps) * gamma + beta

    assert out.shape == (B, S, H)
    assert jnp.allclose(out, ref, atol=2e-2, rtol=2e-2), (
        float(jnp.max(jnp.abs(out - ref))))

    print("KERNEL_OK")
</pallas_src>

<mosaic_0001>
module attributes {stable_mosaic.version = 11 : i64} {
  func.func @_bert_output_kernel(%arg0: i32, %arg1: memref<16x128xf32, #tpu.memory_space<vmem>>, %arg2: memref<128x32xbf16, #tpu.memory_space<vmem>>, %arg3: memref<1x32xf32, #tpu.memory_space<vmem>>, %arg4: memref<16x32xf32, #tpu.memory_space<vmem>>, %arg5: memref<1x32xf32, #tpu.memory_space<vmem>>, %arg6: memref<1x32xf32, #tpu.memory_space<vmem>>, %arg7: memref<16x32xf32, #tpu.memory_space<vmem>>) attributes {dimension_semantics = [#tpu.dimension_semantics<parallel>], iteration_bounds = array<i64: 1>, scalar_prefetch = 0 : i64, scratch_operands = 0 : i64, tpu.core_type = #tpu.core_type<tc>, window_params = [{transform_indices = @transform_0, window_bounds = array<i64: 16, 128>}, {pipeline_mode = #tpu.pipeline_mode<synchronous>, transform_indices = @transform_1, window_bounds = array<i64: 128, 32>}, {pipeline_mode = #tpu.pipeline_mode<synchronous>, transform_indices = @transform_2, window_bounds = array<i64: 1, 32>}, {transform_indices = @transform_3, window_bounds = array<i64: 16, 32>}, {pipeline_mode = #tpu.pipeline_mode<synchronous>, transform_indices = @transform_4, window_bounds = array<i64: 1, 32>}, {pipeline_mode = #tpu.pipeline_mode<synchronous>, transform_indices = @transform_5, window_bounds = array<i64: 1, 32>}, {transform_indices = @transform_6, window_bounds = array<i64: 16, 32>}]} {
    %c0 = arith.constant 0 : index
    %c0_0 = arith.constant 0 : index
    %0 = vector.load %arg2[%c0, %c0_0] : memref<128x32xbf16, #tpu.memory_space<vmem>>, vector<128x32xbf16>
    %c0_1 = arith.constant 0 : index
    %c0_2 = arith.constant 0 : index
    %1 = vector.load %arg3[%c0_1, %c0_2] : memref<1x32xf32, #tpu.memory_space<vmem>>, vector<1x32xf32>
    %c0_3 = arith.constant 0 : index
    %c0_4 = arith.constant 0 : index
    %2 = vector.load %arg5[%c0_3, %c0_4] : memref<1x32xf32, #tpu.memory_space<vmem>>, vector<1x32xf32>
    %c0_5 = arith.constant 0 : index
    %c0_6 = arith.constant 0 : index
    %3 = vector.load %arg6[%c0_5, %c0_6] : memref<1x32xf32, #tpu.memory_space<vmem>>, vector<1x32xf32>
    %c0_7 = arith.constant 0 : index
    %c0_8 = arith.constant 0 : index
    %4 = vector.load %arg1[%c0_7, %c0_8] : memref<16x128xf32, #tpu.memory_space<vmem>>, vector<8x128xf32>
    %5 = arith.truncf %4 : vector<8x128xf32> to vector<8x128xbf16>
    %cst = arith.constant dense<0.000000e+00> : vector<8x32xf32>
    %6 = tpu.matmul %5, %0, %cst {dimension_numbers = #tpu.dot_dimension_numbers<[1], [0], [0], [1], [0, 0, 1, 1], [], []>} : vector<8x128xbf16>, vector<128x32xbf16>, vector<8x32xf32> -> vector<8x32xf32>
    %7 = vector.broadcast %1 : vector<1x32xf32> to vector<8x32xf32>
    %8 = arith.addf %6, %7 : vector<8x32xf32>
    %c8 = arith.constant 8 : index
    %c0_9 = arith.constant 0 : index
    %9 = vector.load %arg1[%c8, %c0_9] : memref<16x128xf32, #tpu.memory_space<vmem>>, vector<8x128xf32>
    %10 = arith.truncf %9 : vector<8x128xf32> to vector<8x128xbf16>
    %cst_10 = arith.constant dense<0.000000e+00> : vector<8x32xf32>
    %11 = tpu.matmul %10, %0, %cst_10 {dimension_numbers = #tpu.dot_dimension_numbers<[1], [0], [0], [1], [0, 0, 1, 1], [], []>} : vector<8x128xbf16>, vector<128x32xbf16>, vector<8x32xf32> -> vector<8x32xf32>
    %12 = vector.broadcast %1 : vector<1x32xf32> to vector<8x32xf32>
    %13 = arith.addf %11, %12 : vector<8x32xf32>
    %c0_11 = arith.constant 0 : index
    %c0_12 = arith.constant 0 : index
    %14 = vector.load %arg4[%c0_11, %c0_12] : memref<16x32xf32, #tpu.memory_space<vmem>>, vector<8x32xf32>
    %15 = arith.addf %8, %14 : vector<8x32xf32>
    %cst_13 = arith.constant dense<0.000000e+00> : vector<8xf32>
    %16 = vector.multi_reduction <add>, %15, %cst_13 [1] : vector<8x32xf32> to vector<8xf32>
    %17 = vector.shape_cast %16 : vector<8xf32> to vector<8x1xf32>
    %18 = arith.mulf %15, %15 : vector<8x32xf32>
    %cst_14 = arith.constant dense<0.000000e+00> : vector<8xf32>
    %19 = vector.multi_reduction <add>, %18, %cst_14 [1] : vector<8x32xf32> to vector<8xf32>
    %20 = vector.shape_cast %19 : vector<8xf32> to vector<8x1xf32>
    %cst_15 = arith.constant 3.125000e-02 : f32
    %21 = vector.broadcast %cst_15 : f32 to vector<8x1xf32>
    %22 = arith.mulf %17, %21 : vector<8x1xf32>
    %cst_16 = arith.constant 3.125000e-02 : f32
    %23 = vector.broadcast %cst_16 : f32 to vector<8x1xf32>
    %24 = arith.mulf %20, %23 : vector<8x1xf32>
    %25 = arith.mulf %22, %22 : vector<8x1xf32>
    %26 = arith.subf %24, %25 : vector<8x1xf32>
    %cst_17 = arith.constant 0.000000e+00 : f32
    %27 = vector.broadcast %cst_17 : f32 to vector<8x1xf32>
    %28 = arith.maximumf %26, %27 : vector<8x1xf32>
    %29 = vector.broadcast %22 : vector<8x1xf32> to vector<8x32xf32>
    %30 = arith.subf %15, %29 : vector<8x32xf32>
    %cst_18 = arith.constant 9.99999996E-13 : f32
    %31 = vector.broadcast %cst_18 : f32 to vector<8x1xf32>
    %32 = arith.addf %28, %31 : vector<8x1xf32>
    %33 = math.rsqrt %32 : vector<8x1xf32>
    %34 = vector.broadcast %33 : vector<8x1xf32> to vector<8x32xf32>
    %35 = arith.mulf %30, %34 : vector<8x32xf32>
    %36 = vector.broadcast %2 : vector<1x32xf32> to vector<8x32xf32>
    %37 = arith.mulf %35, %36 : vector<8x32xf32>
    %38 = vector.broadcast %3 : vector<1x32xf32> to vector<8x32xf32>
    %39 = arith.addf %37, %38 : vector<8x32xf32>
    %c0_19 = arith.constant 0 : index
    %c0_20 = arith.constant 0 : index
    %40 = vector.load %arg7[%c0_19, %c0_20] : memref<16x32xf32, #tpu.memory_space<vmem>>, vector<8x32xf32>
    tpu.vector_store %arg7[%c0_19, %c0_20], %39 {strides = array<i32>} : memref<16x32xf32, #tpu.memory_space<vmem>>, vector<8x32xf32>,
    %c8_21 = arith.constant 8 : index
    %c0_22 = arith.constant 0 : index
    %41 = vector.load %arg4[%c8_21, %c0_22] : memref<16x32xf32, #tpu.memory_space<vmem>>, vector<8x32xf32>
    %42 = arith.addf %13, %41 : vector<8x32xf32>
    %cst_23 = arith.constant dense<0.000000e+00> : vector<8xf32>
    %43 = vector.multi_reduction <add>, %42, %cst_23 [1] : vector<8x32xf32> to vector<8xf32>
    %44 = vector.shape_cast %43 : vector<8xf32> to vector<8x1xf32>
    %45 = arith.mulf %42, %42 : vector<8x32xf32>
    %cst_24 = arith.constant dense<0.000000e+00> : vector<8xf32>
    %46 = vector.multi_reduction <add>, %45, %cst_24 [1] : vector<8x32xf32> to vector<8xf32>
    %47 = vector.shape_cast %46 : vector<8xf32> to vector<8x1xf32>
    %cst_25 = arith.constant 3.125000e-02 : f32
    %48 = vector.broadcast %cst_25 : f32 to vector<8x1xf32>
    %49 = arith.mulf %44, %48 : vector<8x1xf32>
    %cst_26 = arith.constant 3.125000e-02 : f32
    %50 = vector.broadcast %cst_26 : f32 to vector<8x1xf32>
    %51 = arith.mulf %47, %50 : vector<8x1xf32>
    %52 = arith.mulf %49, %49 : vector<8x1xf32>
    %53 = arith.subf %51, %52 : vector<8x1xf32>
    %cst_27 = arith.constant 0.000000e+00 : f32
    %54 = vector.broadcast %cst_27 : f32 to vector<8x1xf32>
    %55 = arith.maximumf %53, %54 : vector<8x1xf32>
    %56 = vector.broadcast %49 : vector<8x1xf32> to vector<8x32xf32>
    %57 = arith.subf %42, %56 : vector<8x32xf32>
    %cst_28 = arith.constant 9.99999996E-13 : f32
    %58 = vector.broadcast %cst_28 : f32 to vector<8x1xf32>
    %59 = arith.addf %55, %58 : vector<8x1xf32>
    %60 = math.rsqrt %59 : vector<8x1xf32>
    %61 = vector.broadcast %60 : vector<8x1xf32> to vector<8x32xf32>
    %62 = arith.mulf %57, %61 : vector<8x32xf32>
    %63 = vector.broadcast %2 : vector<1x32xf32> to vector<8x32xf32>
    %64 = arith.mulf %62, %63 : vector<8x32xf32>
    %65 = vector.broadcast %3 : vector<1x32xf32> to vector<8x32xf32>
    %66 = arith.addf %64, %65 : vector<8x32xf32>
    %c8_29 = arith.constant 8 : index
    %c0_30 = arith.constant 0 : index
    %67 = vector.load %arg7[%c8_29, %c0_30] : memref<16x32xf32, #tpu.memory_space<vmem>>, vector<8x32xf32>
    tpu.vector_store %arg7[%c8_29, %c0_30], %66 {strides = array<i32>} : memref<16x32xf32, #tpu.memory_space<vmem>>, vector<8x32xf32>,
    return
  }
  func.func @transform_0(%arg0: i32) -> (i32, i32) {
    %c0_i32 = arith.constant 0 : i32
    %c0_i32_0 = arith.constant 0 : i32
    return %arg0, %c0_i32 : i32, i32
  }
  func.func @transform_1(%arg0: i32) -> (i32, i32) {
    %c0_i32 = arith.constant 0 : i32
    %c0_i32_0 = arith.constant 0 : i32
    %c0_i32_1 = arith.constant 0 : i32
    return %c0_i32, %c0_i32_0 : i32, i32
  }
  func.func @transform_2(%arg0: i32) -> (i32, i32) {
    %c0_i32 = arith.constant 0 : i32
    %c0_i32_0 = arith.constant 0 : i32
    %c0_i32_1 = arith.constant 0 : i32
    return %c0_i32, %c0_i32_0 : i32, i32
  }
  func.func @transform_3(%arg0: i32) -> (i32, i32) {
    %c0_i32 = arith.constant 0 : i32
    %c0_i32_0 = arith.constant 0 : i32
    return %arg0, %c0_i32 : i32, i32
  }
  func.func @transform_4(%arg0: i32) -> (i32, i32) {
    %c0_i32 = arith.constant 0 : i32
    %c0_i32_0 = arith.constant 0 : i32
    %c0_i32_1 = arith.constant 0 : i32
    return %c0_i32, %c0_i32_0 : i32, i32
  }
  func.func @transform_5(%arg0: i32) -> (i32, i32) {
    %c0_i32 = arith.constant 0 : i32
    %c0_i32_0 = arith.constant 0 : i32
    %c0_i32_1 = arith.constant 0 : i32
    return %c0_i32, %c0_i32_0 : i32, i32
  }
  func.func @transform_6(%arg0: i32) -> (i32, i32) {
    %c0_i32 = arith.constant 0 : i32
    %c0_i32_0 = arith.constant 0 : i32
    return %arg0, %c0_i32 : i32, i32
  }
}

</mosaic_0001>

<llo_original>
// kernel: tpu_custom_call.1
$region0: #{tpu_custom_call.1}
  #allocation0 [shape = 'u32[]', space=smem, size = 0x4, offset = 0x4, fixed_abs, tag = 'smem constant byte address 0x4 - core index']
  #allocation1 [shape = 'u32[144,128]{1,0:T(1,128)}', space=vmem, size = 0x12000, scoped, tag = 'internal scratch']
  %s0 = inlined_call_operand.vmem [shape: f32[16,128], index: 0, kind: input, shape index: {}]
  %s1 = inlined_call_operand.vmem [shape: bf16[128,32], index: 1, kind: input, shape index: {}]
  %s2 = inlined_call_operand.vmem [shape: f32[1,32], index: 2, kind: input, shape index: {}]
  %s3 = inlined_call_operand.vmem [shape: f32[16,32], index: 3, kind: input, shape index: {}]
  %s4 = inlined_call_operand.vmem [shape: f32[1,32], index: 4, kind: input, shape index: {}]
  %s5 = inlined_call_operand.vmem [shape: f32[1,32], index: 5, kind: input, shape index: {}]
  %s6 = inlined_call_operand.hbm [shape: f32[16,32], index: 6, kind: output, shape index: {}]
  %s7 = sld [smem:[#allocation0]]
  $region34: #{tpu_custom_call.1} parent=0
    _
  %s9 = ssub.s32 1, %s7
  %s10 = scalar_select 0, %s9, %s7
  $region1: #{tpu_custom_call.1} parent=0
    #allocation2 [shape = 'u8[8192]{0}', space=vmem, size = 0x2000, scoped, tag = 'output window, operand 0, single buffered']
    #allocation3 [shape = 's32[1]{0}', space=sflag, size = 0x4, scoped, tag = 'scoped memory for tpu_custom_call.1']
    %11 = vsyncpa [#allocation3], 0
    // Predicated region
    $region2: #{tpu_custom_call.1} parent=1 // pred_check
      _
    $region3: #{tpu_custom_call.1} parent=1 // pred_check_branch
      %13 = sbr.rel (0) target = $region5
    $region4: #{tpu_custom_call.1} parent=1 // pred_region
      _
    $region5: #{tpu_custom_call.1} parent=1 // pred_fallthru
      _
    // Predicated region
    $region6: #{tpu_custom_call.1} parent=1 // pred_check
      _
    $region7: #{tpu_custom_call.1} parent=1 // pred_check_branch
      %15 = sbr.rel (0) target = $region9
    $region8: #{tpu_custom_call.1} parent=1 // pred_region
      _
    $region9: #{tpu_custom_call.1} parent=1 // pred_fallthru
      _
    // Predicated region
    $region10: #{tpu_custom_call.1} parent=1 // pred_check
      _
    $region11: #{tpu_custom_call.1} parent=1 // pred_check_branch
      %17 = sbr.rel (0) target = $region13
    $region12: #{tpu_custom_call.1} parent=1 // pred_region
      _
    $region13: #{tpu_custom_call.1} parent=1 // pred_fallthru
      _
    // Predicated region
    $region14: #{tpu_custom_call.1} parent=1 // pred_check
      _
    $region15: #{tpu_custom_call.1} parent=1 // pred_check_branch
      %19 = sbr.rel (0) target = $region17
    $region16: #{tpu_custom_call.1} parent=1 // pred_region
      _
    $region17: #{tpu_custom_call.1} parent=1 // pred_fallthru
      _
    // Predicated region
    $region18: #{tpu_custom_call.1} parent=1 // pred_check
      _
    $region19: #{tpu_custom_call.1} parent=1 // pred_check_branch
      %21 = sbr.rel (0) target = $region21
    $region20: #{tpu_custom_call.1} parent=1 // pred_region
      _
    $region21: #{tpu_custom_call.1} parent=1 // pred_fallthru
      _
    // Predicated region
    $region22: #{tpu_custom_call.1} parent=1 // pred_check
      _
    $region23: #{tpu_custom_call.1} parent=1 // pred_check_branch
      %23 = sbr.rel (0) target = $region25
    $region24: #{tpu_custom_call.1} parent=1 // pred_region
      _
    $region25: #{tpu_custom_call.1} parent=1 // pred_fallthru
      _
    %v25 = vld [vmem:[%s1] sm:$0xf]
    %v26 = vld [vmem:[%s1 + $0x4] sm:$0xf]
    %v27 = vld [vmem:[%s1 + $0x8] sm:$0xf]
    %v28 = vld [vmem:[%s1 + $0xc] sm:$0xf]
    %v29 = vld [vmem:[%s1 + $0x10] sm:$0xf]
    %v30 = vld [vmem:[%s1 + $0x14] sm:$0xf]
    %v31 = vld [vmem:[%s1 + $0x18] sm:$0xf]
    %v32 = vld [vmem:[%s1 + $0x1c] sm:$0xf]
    %v33 = vld [vmem:[%s1 + $0x20] sm:$0xf]
    %v34 = vld [vmem:[%s1 + $0x24] sm:$0xf]
    %v35 = vld [vmem:[%s1 + $0x28] sm:$0xf]
    %v36 = vld [vmem:[%s1 + $0x2c] sm:$0xf]
    %v37 = vld [vmem:[%s1 + $0x30] sm:$0xf]
    %v38 = vld [vmem:[%s1 + $0x34] sm:$0xf]
    %v39 = vld [vmem:[%s1 + $0x38] sm:$0xf]
    %v40 = vld [vmem:[%s1 + $0x3c] sm:$0xf]
    %v41 = vld [vmem:[%s2] sm:$0x1]
    %v42 = vld [vmem:[%s4] sm:$0x1]
    %v43 = vld [vmem:[%s5] sm:$0x1]
    %v44 = vld [vmem:[%s0] sm:$0xff]
    %v45 = vpack.c.bf16 %v44, %v44
    %v47 = vlaneseq
    %v48 = vshrl.u32 %v47, 7
    %v49 = vsub.s32 0, %v48
    %v50 = vrot.slane %v41, %v49
    %v68 = vunpack.c.l.b16 %v25
    %v69 = vunpack.c.l.b16 %v26
    %v70 = vunpack.c.l.b16 %v27
    %v71 = vunpack.c.l.b16 %v28
    %v72 = vunpack.c.l.b16 %v29
    %v73 = vunpack.c.l.b16 %v30
    %v74 = vunpack.c.l.b16 %v31
    %v75 = vunpack.c.l.b16 %v32
    %v76 = vunpack.c.l.b16 %v33
    %v77 = vunpack.c.l.b16 %v34
    %v78 = vunpack.c.l.b16 %v35
    %v79 = vunpack.c.l.b16 %v36
    %v80 = vunpack.c.l.b16 %v37
    %v81 = vunpack.c.l.b16 %v38
    %v82 = vunpack.c.l.b16 %v39
    %v83 = vunpack.c.l.b16 %v40
    %v84 = vpack.c.b16 %v69, %v68
    %v85 = vpack.c.b16 %v71, %v70
    %v86 = vpack.c.b16 %v73, %v72
    %v87 = vpack.c.b16 %v75, %v74
    %v88 = vpack.c.b16 %v77, %v76
    %v89 = vpack.c.b16 %v79, %v78
    %v90 = vpack.c.b16 %v81, %v80
    %v91 = vpack.c.b16 %v83, %v82
    %100 = vmatprep.subr.bf16.mxu0 0
    %101 = vmatpush1.bf16.msra.mxu0 %v84
    %102 = vmatprep.subr.bf16.mxu0 0
    %103 = vmatpush1.bf16.msra.mxu0 %v85
    %104 = vmatprep.subr.bf16.mxu0 0
    %105 = vmatpush1.bf16.msra.mxu0 %v86
    %106 = vmatprep.subr.bf16.mxu0 0
    %107 = vmatpush1.bf16.msra.mxu0 %v87
    %108 = vmatprep.subr.bf16.mxu0 0
    %109 = vmatpush1.bf16.msra.mxu0 %v88
    %110 = vmatprep.subr.bf16.mxu0 0
    %111 = vmatpush1.bf16.msra.mxu0 %v89
    %112 = vmatprep.subr.bf16.mxu0 0
    %113 = vmatpush1.bf16.msra.mxu0 %v90
    %114 = vmatprep.subr.bf16.mxu0 0
    %115 = vmatpush1.bf16.msra.mxu0 %v91
    %116 = vmatprep.subr.bf16.mxu0 0
    %117 = vmatpush1.bf16.msra.mxu0 0
    %118 = vmatprep.subr.bf16.mxu0 0
    %119 = vmatpush1.bf16.msra.mxu0 0
    %120 = vmatprep.subr.bf16.mxu0 0
    %121 = vmatpush1.bf16.msra.mxu0 0
    %122 = vmatprep.subr.bf16.mxu0 0
    %123 = vmatpush1.bf16.msra.mxu0 0
    %124 = vmatprep.subr.bf16.mxu0 0
    %125 = vmatpush1.bf16.msra.mxu0 0
    %126 = vmatprep.subr.bf16.mxu0 0
    %127 = vmatpush1.bf16.msra.mxu0 0
    %128 = vmatprep.subr.bf16.mxu0 0
    %129 = vmatpush1.bf16.msra.mxu0 0
    %130 = vmatprep.subr.bf16.mxu0 0
    %131 = vmatpush1.bf16.msra.mxu0 0
    %132 = vmatprep.mubr.bf16.mxu0 0
    %133 = vmatmul.mubr.bf16.gmra.mrb[0].mxu0 %v45
    %v134 = vpop.f32.mrb[0].mxu0
    %v135 = vadd.f32 %v50, %v134
    %v136 = vpop.f32.mrb[0].mxu0
    %v137 = vpop.f32.mrb[0].mxu0
    %v138 = vpop.f32.mrb[0].mxu0
    %139 = vdwg.mxu0
    %v140 = vld [vmem:[%s0 + $0x8] sm:$0xff]
    %v141 = vpack.c.bf16 %v140, %v140
    %142 = vmatprep.subr.bf16.mxu0 0
    %143 = vmatpush1.bf16.msra.mxu0 %v84
    %144 = vmatprep.subr.bf16.mxu0 0
    %145 = vmatpush1.bf16.msra.mxu0 %v85
    %146 = vmatprep.subr.bf16.mxu0 0
    %147 = vmatpush1.bf16.msra.mxu0 %v86
    %148 = vmatprep.subr.bf16.mxu0 0
    %149 = vmatpush1.bf16.msra.mxu0 %v87
    %150 = vmatprep.subr.bf16.mxu0 0
    %151 = vmatpush1.bf16.msra.mxu0 %v88
    %152 = vmatprep.subr.bf16.mxu0 0
    %153 = vmatpush1.bf16.msra.mxu0 %v89
    %154 = vmatprep.subr.bf16.mxu0 0
    %155 = vmatpush1.bf16.msra.mxu0 %v90
    %156 = vmatprep.subr.bf16.mxu0 0
    %157 = vmatpush1.bf16.msra.mxu0 %v91
    %158 = vmatprep.subr.bf16.mxu0 0
    %159 = vmatpush1.bf16.msra.mxu0 0
    %160 = vmatprep.subr.bf16.mxu0 0
    %161 = vmatpush1.bf16.msra.mxu0 0
    %162 = vmatprep.subr.bf16.mxu0 0
    %163 = vmatpush1.bf16.msra.mxu0 0
    %164 = vmatprep.subr.bf16.mxu0 0
    %165 = vmatpush1.bf16.msra.mxu0 0
    %166 = vmatprep.subr.bf16.mxu0 0
    %167 = vmatpush1.bf16.msra.mxu0 0
    %168 = vmatprep.subr.bf16.mxu0 0
    %169 = vmatpush1.bf16.msra.mxu0 0
    %170 = vmatprep.subr.bf16.mxu0 0
    %171 = vmatpush1.bf16.msra.mxu0 0
    %172 = vmatprep.subr.bf16.mxu0 0
    %173 = vmatpush1.bf16.msra.mxu0 0
    %174 = vmatprep.mubr.bf16.mxu0 0
    %175 = vmatmul.mubr.bf16.gmra.mrb[0].mxu0 %v141
    %v176 = vpop.f32.mrb[0].mxu0
    %v177 = vadd.f32 %v50, %v176
    %v178 = vpop.f32.mrb[0].mxu0
    %v179 = vpop.f32.mrb[0].mxu0
    %v180 = vpop.f32.mrb[0].mxu0
    %181 = vdwg.mxu0
    %v182 = vld [vmem:[%s3] sm:$0xff]
    %v183 = vadd.f32 %v135, %v182
    %vm184 = vcmask 261120
    %v185 = vsel %vm184, %v183, 0.0
    %186 = vadd.xlane.f32.xlu0 %v185
    %v187 = vpop.xlane.xlu0 %186
    %v188 = vmul.f32 %v183, %v183
    %v189 = vsel %vm184, %v188, 0.0
    %190 = vadd.xlane.f32.xlu0 %v189
    %v191 = vpop.xlane.xlu0 %190
    %v192 = vmul.f32 %v187, 0.03125
    %v193 = vmul.f32 %v191, 0.03125
    %v194 = vmul.f32 %v192, %v192
    %v195 = vsub.f32 %v193, %v194
    %v196 = vmax.f32 %v195, 0.0
    %v197 = vsub.f32 %v183, %v192
    %v198 = vadd.f32 %v196, 1e-12
    %v199 = vrsqrt.pop %v198
    %v200 = vmul.f32 %v197, %v199
    %v202 = vlaneseq
    %v203 = vshrl.u32 %v202, 7
    %v204 = vsub.s32 0, %v203
    %v205 = vrot.slane %v42, %v204
    %v207 = vmul.f32 %v200, %v205
    %v209 = vlaneseq
    %v210 = vshrl.u32 %v209, 7
    %v211 = vsub.s32 0, %v210
    %v212 = vrot.slane %v43, %v211
    %v214 = vadd.f32 %v207, %v212
    %215 = vst.msk [vmem:[#allocation2] sm:$0xff] %vm184, %v214
    %v216 = vld [vmem:[%s3 + $0x8] sm:$0xff]
    %v217 = vadd.f32 %v177, %v216
    %v218 = vsel %vm184, %v217, 0.0
    %219 = vadd.xlane.f32.xlu0 %v218
    %v220 = vpop.xlane.xlu0 %219
    %v221 = vmul.f32 %v217, %v217
    %v222 = vsel %vm184, %v221, 0.0
    %223 = vadd.xlane.f32.xlu0 %v222
    %v224 = vpop.xlane.xlu0 %223
    %v225 = vmul.f32 %v220, 0.03125
    %v226 = vmul.f32 %v224, 0.03125
    %v227 = vmul.f32 %v225, %v225
    %v228 = vsub.f32 %v226, %v227
    %v229 = vmax.f32 %v228, 0.0
    %v230 = vsub.f32 %v217, %v225
    %v231 = vadd.f32 %v229, 1e-12
    %v232 = vrsqrt.pop %v231
    %v233 = vmul.f32 %v230, %v232
    %v234 = vmul.f32 %v233, %v205
    %v235 = vadd.f32 %v234, %v212
    %236 = vst.msk [vmem:[#allocation2 + $0x8] sm:$0xff] %vm184, %v235
    // Predicated region
    $region26: #{tpu_custom_call.1} parent=1 // pred_check
      _
    $region27: #{tpu_custom_call.1} parent=1 // pred_check_branch
      %238 = sbr.rel (0) target = $region29
    $region28: #{tpu_custom_call.1} parent=1 // pred_region
      %s240 = ssub.s32 256, 256
      %241 = vsyncadd [#allocation3], %s240
      %s242 = sshll.u32 [#allocation2], 4
      %s243 = int_to_ptr.vmem [resolvable:$true] %s242
      %248 = dma.vmem_to_hbm [thread:$0]  %s243, 256, %s6, [#allocation3], 128, 128, 8
    $region29: #{tpu_custom_call.1} parent=1 // pred_fallthru
      _
    // Predicated region
    $region30: #{tpu_custom_call.1} parent=1 // pred_check
      _
    $region31: #{tpu_custom_call.1} parent=1 // pred_check_branch
      %250 = sbr.rel (0) target = $region33
    $region32: #{tpu_custom_call.1} parent=1 // pred_region
      %251 = dma.done [#allocation3], 256
    $region33: #{tpu_custom_call.1} parent=1 // pred_fallthru
      _
    %252 = vsyncpa [#allocation3], 1

</llo_original>
